<compile_context>
chip_gen: v7x
topology: tpu7x:2x2x1
jax: 0.10.0
libtpu: 0.0.40
codegen_flags: <defaults>
</compile_context>

<pallas_src>
import jax
import jax.numpy as jnp
from jax.experimental import pallas as pl
from jax.experimental.pallas import tpu as pltpu


def _make_lstm_mean_pool_kernel(T, B_pad, D, H):
    """Build the kernel with static T / padded-B / D / H baked in via closure.

    Expects gate columns already permuted to [i, f, o, g] (sigmoid block
    first, tanh block last).
    """

    def kernel(x_ref, wih_ref, whh_ref, b_ref, out_ref):
        # ---- Hoisted input projection: one batched MXU pass for all steps.
        # x_ref: (T*B_pad, D);  wih_ref: (D, 4H);  b_ref: (1, 4H)
        gates_x = (
            jnp.dot(x_ref[...], wih_ref[...], preferred_element_type=jnp.float32)
            + b_ref[...]
        )                                   # (T*B_pad, 4H)
        w_hh = whh_ref[...]                 # (H, 4H), loaded once

        # ---- Recurrence state lives in vregs (loop carries), not VMEM.
        h = jnp.zeros((B_pad, H), jnp.float32)
        c = jnp.zeros((B_pad, H), jnp.float32)
        acc = jnp.zeros((B_pad, H), jnp.float32)

        # Fully unrolled static time loop (T is small and fixed).  Each slice
        # below starts at a static multiple of 8 sublanes (B_pad % 8 == 0).
        for t in range(T):
            gates = gates_x[t * B_pad:(t + 1) * B_pad, :] + jnp.dot(
                h, w_hh, preferred_element_type=jnp.float32)      # (B_pad, 4H)

            # Gate order is [i, f, o, g]: sigmoid over the first 3H lanes,
            # tanh only over the last H lanes (halves per-step EUP work).
            sig = jax.nn.sigmoid(gates[:, : 3 * H])               # i, f, o
            g_g = jnp.tanh(gates[:, 3 * H:])                      # g
            i_g = sig[:, 0 * H:1 * H]
            f_g = sig[:, 1 * H:2 * H]
            o_g = sig[:, 2 * H:3 * H]

            c = f_g * c + i_g * g_g
            h = o_g * jnp.tanh(c)
            acc = acc + h

        # Mean pooling over time; single (B_pad, H) store at the end.
        out_ref[...] = acc * (1.0 / T)

    return kernel


def dynamic_lstm_forward(x, w_ih, w_hh, bias):
    """x: (T, B, D) f32;  w_ih: (D, 4H);  w_hh: (H, 4H);  bias: (1, 4H).

    Weights use the standard PyTorch gate column order [i, f, g, o]
    (transposed so the kernel does x @ W directly).  Returns the mean-pooled
    LSTM output of shape (B, H).
    """
    T, B, D = x.shape
    H = w_hh.shape[0]

    # ---- Wrapper-side layout plumbing (done once, outside the kernel) ----
    # 1) Permute gate columns [i, f, g, o] -> [i, f, o, g] so the kernel can
    #    run one contiguous sigmoid slab and one tanh slab.
    perm = jnp.concatenate([
        jnp.arange(0 * H, 1 * H),   # i
        jnp.arange(1 * H, 2 * H),   # f
        jnp.arange(3 * H, 4 * H),   # o
        jnp.arange(2 * H, 3 * H),   # g
    ])
    w_ih_p = w_ih[:, perm]
    w_hh_p = w_hh[:, perm]
    bias_p = bias[:, perm]

    # 2) Pad batch to a sublane multiple of 8 (zero rows) so every per-step
    #    gate slab is vreg-aligned; padded rows never affect real rows.
    B_pad = max(8, ((B + 7) // 8) * 8)
    x_p = jnp.pad(x, ((0, 0), (0, B_pad - B), (0, 0)))

    # 3) Flatten (T, B_pad, D) -> (T*B_pad, D) so the input projection is a
    #    single matmul inside the kernel.
    x_flat = x_p.reshape(T * B_pad, D)

    kernel = _make_lstm_mean_pool_kernel(T, B_pad, D, H)

    out_pad = pl.pallas_call(
        kernel,
        out_shape=jax.ShapeDtypeStruct((B_pad, H), jnp.float32),
        in_specs=[
            pl.BlockSpec(memory_space=pltpu.MemorySpace.VMEM),  # x (flattened)
            pl.BlockSpec(memory_space=pltpu.MemorySpace.VMEM),  # W_ih (permuted)
            pl.BlockSpec(memory_space=pltpu.MemorySpace.VMEM),  # W_hh (permuted)
            pl.BlockSpec(memory_space=pltpu.MemorySpace.VMEM),  # bias (permuted)
        ],
        out_specs=pl.BlockSpec(memory_space=pltpu.MemorySpace.VMEM),
    )(x_flat, w_ih_p, w_hh_p, bias_p)

    return out_pad[:B, :]


def _reference_lstm_mean_pool(x, w_ih, w_hh, bias):
    """Pure-JAX reference of the same forward (PyTorch gate order [i,f,g,o])."""
    T, B, D = x.shape
    H = w_hh.shape[0]
    h = jnp.zeros((B, H), jnp.float32)
    c = jnp.zeros((B, H), jnp.float32)
    outs = []
    for t in range(T):
        gates = x[t] @ w_ih + h @ w_hh + bias
        i_g = jax.nn.sigmoid(gates[:, 0 * H:1 * H])
        f_g = jax.nn.sigmoid(gates[:, 1 * H:2 * H])
        g_g = jnp.tanh(gates[:, 2 * H:3 * H])
        o_g = jax.nn.sigmoid(gates[:, 3 * H:4 * H])
        c = f_g * c + i_g * g_g
        h = o_g * jnp.tanh(c)
        outs.append(h)
    return jnp.mean(jnp.stack(outs, axis=0), axis=0)


if __name__ == "__main__":
    # Small shapes implied by the module's forward:
    T, B, D, H = 8, 2, 16, 32   # seq, batch, lstm_indim, lstm_nhid

    key = jax.random.PRNGKey(0)
    kx, k1, k2, k3, k4 = jax.random.split(key, 5)

    # Deterministic parameter init (PyTorch-style uniform(-1/sqrt(H), 1/sqrt(H))).
    bound = 1.0 / jnp.sqrt(jnp.float32(H))
    # PyTorch stores weight_ih as (4H, D) / weight_hh as (4H, H); we keep the
    # transposed layouts (D, 4H) / (H, 4H) so the kernel does x @ W directly.
    # Gate column order here is the standard PyTorch [i, f, g, o]; the wrapper
    # permutes it internally.
    w_ih = jax.random.uniform(k1, (D, 4 * H), jnp.float32, -bound, bound)
    w_hh = jax.random.uniform(k2, (H, 4 * H), jnp.float32, -bound, bound)
    b_ih = jax.random.uniform(k3, (4 * H,), jnp.float32, -bound, bound)
    b_hh = jax.random.uniform(k4, (4 * H,), jnp.float32, -bound, bound)
    bias = (b_ih + b_hh).reshape(1, 4 * H)

    x = jax.random.normal(kx, (T, B, D), jnp.float32)

    out = dynamic_lstm_forward(x, w_ih, w_hh, bias)
    out = jax.block_until_ready(out)

    ref = _reference_lstm_mean_pool(x, w_ih, w_hh, bias)
    assert out.shape == (B, H)
    assert jnp.allclose(out, ref, rtol=1e-5, atol=1e-5), "mismatch vs reference"

    print("KERNEL_OK")
</pallas_src>

<mosaic_0001>
module attributes {stable_mosaic.version = 11 : i64} {
  func.func @kernel(%arg0: memref<64x16xf32, #tpu.memory_space<vmem>>, %arg1: memref<16x128xf32, #tpu.memory_space<vmem>>, %arg2: memref<32x128xf32, #tpu.memory_space<vmem>>, %arg3: memref<1x128xf32, #tpu.memory_space<vmem>>, %arg4: memref<8x32xf32, #tpu.memory_space<vmem>>) attributes {dimension_semantics = [], scalar_prefetch = 0 : i64, scratch_operands = 0 : i64, tpu.core_type = #tpu.core_type<tc>} {
    %c0 = arith.constant 0 : index
    %c0_0 = arith.constant 0 : index
    %0 = vector.load %arg0[%c0, %c0_0] : memref<64x16xf32, #tpu.memory_space<vmem>>, vector<64x16xf32>
    %c0_1 = arith.constant 0 : index
    %c0_2 = arith.constant 0 : index
    %1 = vector.load %arg1[%c0_1, %c0_2] : memref<16x128xf32, #tpu.memory_space<vmem>>, vector<16x128xf32>
    %cst = arith.constant dense<0.000000e+00> : vector<64x128xf32>
    %2 = tpu.matmul %0, %1, %cst {dimension_numbers = #tpu.dot_dimension_numbers<[1], [0], [0], [1], [0, 0, 1, 1], [], []>} : vector<64x16xf32>, vector<16x128xf32>, vector<64x128xf32> -> vector<64x128xf32>
    %c0_3 = arith.constant 0 : index
    %c0_4 = arith.constant 0 : index
    %3 = vector.load %arg3[%c0_3, %c0_4] : memref<1x128xf32, #tpu.memory_space<vmem>>, vector<1x128xf32>
    %4 = vector.broadcast %3 : vector<1x128xf32> to vector<64x128xf32>
    %5 = arith.addf %2, %4 : vector<64x128xf32>
    %c0_5 = arith.constant 0 : index
    %c0_6 = arith.constant 0 : index
    %6 = vector.load %arg2[%c0_5, %c0_6] : memref<32x128xf32, #tpu.memory_space<vmem>>, vector<32x128xf32>
    %cst_7 = arith.constant 0.000000e+00 : f32
    %7 = vector.broadcast %cst_7 : f32 to vector<8x32xf32>
    %cst_8 = arith.constant 0.000000e+00 : f32
    %8 = vector.broadcast %cst_8 : f32 to vector<8x32xf32>
    %cst_9 = arith.constant 0.000000e+00 : f32
    %9 = vector.broadcast %cst_9 : f32 to vector<8x32xf32>
    %10 = vector.extract_strided_slice %5 {offsets = [0, 0], sizes = [8, 128], strides = [1, 1]} : vector<64x128xf32> to vector<8x128xf32>
    %cst_10 = arith.constant dense<0.000000e+00> : vector<8x128xf32>
    %11 = tpu.matmul %7, %6, %cst_10 {dimension_numbers = #tpu.dot_dimension_numbers<[1], [0], [0], [1], [0, 0, 1, 1], [], []>} : vector<8x32xf32>, vector<32x128xf32>, vector<8x128xf32> -> vector<8x128xf32>
    %12 = arith.addf %10, %11 : vector<8x128xf32>
    %13 = vector.extract_strided_slice %12 {offsets = [0, 0], sizes = [8, 96], strides = [1, 1]} : vector<8x128xf32> to vector<8x96xf32>
    %14 = arith.negf %13 : vector<8x96xf32>
    %15 = math.exp %14 : vector<8x96xf32>
    %cst_11 = arith.constant 1.000000e+00 : f32
    %16 = vector.broadcast %cst_11 : f32 to vector<8x96xf32>
    %17 = arith.addf %16, %15 : vector<8x96xf32>
    %18 = arith.divf %16, %17 : vector<8x96xf32>
    %19 = vector.extract_strided_slice %12 {offsets = [0, 96], sizes = [8, 32], strides = [1, 1]} : vector<8x128xf32> to vector<8x32xf32>
    %20 = math.tanh %19 : vector<8x32xf32>
    %21 = vector.extract_strided_slice %18 {offsets = [0, 0], sizes = [8, 32], strides = [1, 1]} : vector<8x96xf32> to vector<8x32xf32>
    %22 = vector.extract_strided_slice %18 {offsets = [0, 32], sizes = [8, 32], strides = [1, 1]} : vector<8x96xf32> to vector<8x32xf32>
    %23 = vector.extract_strided_slice %18 {offsets = [0, 64], sizes = [8, 32], strides = [1, 1]} : vector<8x96xf32> to vector<8x32xf32>
    %24 = arith.mulf %22, %8 : vector<8x32xf32>
    %25 = arith.mulf %21, %20 : vector<8x32xf32>
    %26 = arith.addf %24, %25 : vector<8x32xf32>
    %27 = math.tanh %26 : vector<8x32xf32>
    %28 = arith.mulf %23, %27 : vector<8x32xf32>
    %29 = arith.addf %9, %28 : vector<8x32xf32>
    %30 = vector.extract_strided_slice %5 {offsets = [8, 0], sizes = [8, 128], strides = [1, 1]} : vector<64x128xf32> to vector<8x128xf32>
    %cst_12 = arith.constant dense<0.000000e+00> : vector<8x128xf32>
    %31 = tpu.matmul %28, %6, %cst_12 {dimension_numbers = #tpu.dot_dimension_numbers<[1], [0], [0], [1], [0, 0, 1, 1], [], []>} : vector<8x32xf32>, vector<32x128xf32>, vector<8x128xf32> -> vector<8x128xf32>
    %32 = arith.addf %30, %31 : vector<8x128xf32>
    %33 = vector.extract_strided_slice %32 {offsets = [0, 0], sizes = [8, 96], strides = [1, 1]} : vector<8x128xf32> to vector<8x96xf32>
    %34 = arith.negf %33 : vector<8x96xf32>
    %35 = math.exp %34 : vector<8x96xf32>
    %cst_13 = arith.constant 1.000000e+00 : f32
    %36 = vector.broadcast %cst_13 : f32 to vector<8x96xf32>
    %37 = arith.addf %36, %35 : vector<8x96xf32>
    %38 = arith.divf %36, %37 : vector<8x96xf32>
    %39 = vector.extract_strided_slice %32 {offsets = [0, 96], sizes = [8, 32], strides = [1, 1]} : vector<8x128xf32> to vector<8x32xf32>
    %40 = math.tanh %39 : vector<8x32xf32>
    %41 = vector.extract_strided_slice %38 {offsets = [0, 0], sizes = [8, 32], strides = [1, 1]} : vector<8x96xf32> to vector<8x32xf32>
    %42 = vector.extract_strided_slice %38 {offsets = [0, 32], sizes = [8, 32], strides = [1, 1]} : vector<8x96xf32> to vector<8x32xf32>
    %43 = vector.extract_strided_slice %38 {offsets = [0, 64], sizes = [8, 32], strides = [1, 1]} : vector<8x96xf32> to vector<8x32xf32>
    %44 = arith.mulf %42, %26 : vector<8x32xf32>
    %45 = arith.mulf %41, %40 : vector<8x32xf32>
    %46 = arith.addf %44, %45 : vector<8x32xf32>
    %47 = math.tanh %46 : vector<8x32xf32>
    %48 = arith.mulf %43, %47 : vector<8x32xf32>
    %49 = arith.addf %29, %48 : vector<8x32xf32>
    %50 = vector.extract_strided_slice %5 {offsets = [16, 0], sizes = [8, 128], strides = [1, 1]} : vector<64x128xf32> to vector<8x128xf32>
    %cst_14 = arith.constant dense<0.000000e+00> : vector<8x128xf32>
    %51 = tpu.matmul %48, %6, %cst_14 {dimension_numbers = #tpu.dot_dimension_numbers<[1], [0], [0], [1], [0, 0, 1, 1], [], []>} : vector<8x32xf32>, vector<32x128xf32>, vector<8x128xf32> -> vector<8x128xf32>
    %52 = arith.addf %50, %51 : vector<8x128xf32>
    %53 = vector.extract_strided_slice %52 {offsets = [0, 0], sizes = [8, 96], strides = [1, 1]} : vector<8x128xf32> to vector<8x96xf32>
    %54 = arith.negf %53 : vector<8x96xf32>
    %55 = math.exp %54 : vector<8x96xf32>
    %cst_15 = arith.constant 1.000000e+00 : f32
    %56 = vector.broadcast %cst_15 : f32 to vector<8x96xf32>
    %57 = arith.addf %56, %55 : vector<8x96xf32>
    %58 = arith.divf %56, %57 : vector<8x96xf32>
    %59 = vector.extract_strided_slice %52 {offsets = [0, 96], sizes = [8, 32], strides = [1, 1]} : vector<8x128xf32> to vector<8x32xf32>
    %60 = math.tanh %59 : vector<8x32xf32>
    %61 = vector.extract_strided_slice %58 {offsets = [0, 0], sizes = [8, 32], strides = [1, 1]} : vector<8x96xf32> to vector<8x32xf32>
    %62 = vector.extract_strided_slice %58 {offsets = [0, 32], sizes = [8, 32], strides = [1, 1]} : vector<8x96xf32> to vector<8x32xf32>
    %63 = vector.extract_strided_slice %58 {offsets = [0, 64], sizes = [8, 32], strides = [1, 1]} : vector<8x96xf32> to vector<8x32xf32>
    %64 = arith.mulf %62, %46 : vector<8x32xf32>
    %65 = arith.mulf %61, %60 : vector<8x32xf32>
    %66 = arith.addf %64, %65 : vector<8x32xf32>
    %67 = math.tanh %66 : vector<8x32xf32>
    %68 = arith.mulf %63, %67 : vector<8x32xf32>
    %69 = arith.addf %49, %68 : vector<8x32xf32>
    %70 = vector.extract_strided_slice %5 {offsets = [24, 0], sizes = [8, 128], strides = [1, 1]} : vector<64x128xf32> to vector<8x128xf32>
    %cst_16 = arith.constant dense<0.000000e+00> : vector<8x128xf32>
    %71 = tpu.matmul %68, %6, %cst_16 {dimension_numbers = #tpu.dot_dimension_numbers<[1], [0], [0], [1], [0, 0, 1, 1], [], []>} : vector<8x32xf32>, vector<32x128xf32>, vector<8x128xf32> -> vector<8x128xf32>
    %72 = arith.addf %70, %71 : vector<8x128xf32>
    %73 = vector.extract_strided_slice %72 {offsets = [0, 0], sizes = [8, 96], strides = [1, 1]} : vector<8x128xf32> to vector<8x96xf32>
    %74 = arith.negf %73 : vector<8x96xf32>
    %75 = math.exp %74 : vector<8x96xf32>
    %cst_17 = arith.constant 1.000000e+00 : f32
    %76 = vector.broadcast %cst_17 : f32 to vector<8x96xf32>
    %77 = arith.addf %76, %75 : vector<8x96xf32>
    %78 = arith.divf %76, %77 : vector<8x96xf32>
    %79 = vector.extract_strided_slice %72 {offsets = [0, 96], sizes = [8, 32], strides = [1, 1]} : vector<8x128xf32> to vector<8x32xf32>
    %80 = math.tanh %79 : vector<8x32xf32>
    %81 = vector.extract_strided_slice %78 {offsets = [0, 0], sizes = [8, 32], strides = [1, 1]} : vector<8x96xf32> to vector<8x32xf32>
    %82 = vector.extract_strided_slice %78 {offsets = [0, 32], sizes = [8, 32], strides = [1, 1]} : vector<8x96xf32> to vector<8x32xf32>
    %83 = vector.extract_strided_slice %78 {offsets = [0, 64], sizes = [8, 32], strides = [1, 1]} : vector<8x96xf32> to vector<8x32xf32>
    %84 = arith.mulf %82, %66 : vector<8x32xf32>
    %85 = arith.mulf %81, %80 : vector<8x32xf32>
    %86 = arith.addf %84, %85 : vector<8x32xf32>
    %87 = math.tanh %86 : vector<8x32xf32>
    %88 = arith.mulf %83, %87 : vector<8x32xf32>
    %89 = arith.addf %69, %88 : vector<8x32xf32>
    %90 = vector.extract_strided_slice %5 {offsets = [32, 0], sizes = [8, 128], strides = [1, 1]} : vector<64x128xf32> to vector<8x128xf32>
    %cst_18 = arith.constant dense<0.000000e+00> : vector<8x128xf32>
    %91 = tpu.matmul %88, %6, %cst_18 {dimension_numbers = #tpu.dot_dimension_numbers<[1], [0], [0], [1], [0, 0, 1, 1], [], []>} : vector<8x32xf32>, vector<32x128xf32>, vector<8x128xf32> -> vector<8x128xf32>
    %92 = arith.addf %90, %91 : vector<8x128xf32>
    %93 = vector.extract_strided_slice %92 {offsets = [0, 0], sizes = [8, 96], strides = [1, 1]} : vector<8x128xf32> to vector<8x96xf32>
    %94 = arith.negf %93 : vector<8x96xf32>
    %95 = math.exp %94 : vector<8x96xf32>
    %cst_19 = arith.constant 1.000000e+00 : f32
    %96 = vector.broadcast %cst_19 : f32 to vector<8x96xf32>
    %97 = arith.addf %96, %95 : vector<8x96xf32>
    %98 = arith.divf %96, %97 : vector<8x96xf32>
    %99 = vector.extract_strided_slice %92 {offsets = [0, 96], sizes = [8, 32], strides = [1, 1]} : vector<8x128xf32> to vector<8x32xf32>
    %100 = math.tanh %99 : vector<8x32xf32>
    %101 = vector.extract_strided_slice %98 {offsets = [0, 0], sizes = [8, 32], strides = [1, 1]} : vector<8x96xf32> to vector<8x32xf32>
    %102 = vector.extract_strided_slice %98 {offsets = [0, 32], sizes = [8, 32], strides = [1, 1]} : vector<8x96xf32> to vector<8x32xf32>
    %103 = vector.extract_strided_slice %98 {offsets = [0, 64], sizes = [8, 32], strides = [1, 1]} : vector<8x96xf32> to vector<8x32xf32>
    %104 = arith.mulf %102, %86 : vector<8x32xf32>
    %105 = arith.mulf %101, %100 : vector<8x32xf32>
    %106 = arith.addf %104, %105 : vector<8x32xf32>
    %107 = math.tanh %106 : vector<8x32xf32>
    %108 = arith.mulf %103, %107 : vector<8x32xf32>
    %109 = arith.addf %89, %108 : vector<8x32xf32>
    %110 = vector.extract_strided_slice %5 {offsets = [40, 0], sizes = [8, 128], strides = [1, 1]} : vector<64x128xf32> to vector<8x128xf32>
    %cst_20 = arith.constant dense<0.000000e+00> : vector<8x128xf32>
    %111 = tpu.matmul %108, %6, %cst_20 {dimension_numbers = #tpu.dot_dimension_numbers<[1], [0], [0], [1], [0, 0, 1, 1], [], []>} : vector<8x32xf32>, vector<32x128xf32>, vector<8x128xf32> -> vector<8x128xf32>
    %112 = arith.addf %110, %111 : vector<8x128xf32>
    %113 = vector.extract_strided_slice %112 {offsets = [0, 0], sizes = [8, 96], strides = [1, 1]} : vector<8x128xf32> to vector<8x96xf32>
    %114 = arith.negf %113 : vector<8x96xf32>
    %115 = math.exp %114 : vector<8x96xf32>
    %cst_21 = arith.constant 1.000000e+00 : f32
    %116 = vector.broadcast %cst_21 : f32 to vector<8x96xf32>
    %117 = arith.addf %116, %115 : vector<8x96xf32>
    %118 = arith.divf %116, %117 : vector<8x96xf32>
    %119 = vector.extract_strided_slice %112 {offsets = [0, 96], sizes = [8, 32], strides = [1, 1]} : vector<8x128xf32> to vector<8x32xf32>
    %120 = math.tanh %119 : vector<8x32xf32>
    %121 = vector.extract_strided_slice %118 {offsets = [0, 0], sizes = [8, 32], strides = [1, 1]} : vector<8x96xf32> to vector<8x32xf32>
    %122 = vector.extract_strided_slice %118 {offsets = [0, 32], sizes = [8, 32], strides = [1, 1]} : vector<8x96xf32> to vector<8x32xf32>
    %123 = vector.extract_strided_slice %118 {offsets = [0, 64], sizes = [8, 32], strides = [1, 1]} : vector<8x96xf32> to vector<8x32xf32>
    %124 = arith.mulf %122, %106 : vector<8x32xf32>
    %125 = arith.mulf %121, %120 : vector<8x32xf32>
    %126 = arith.addf %124, %125 : vector<8x32xf32>
    %127 = math.tanh %126 : vector<8x32xf32>
    %128 = arith.mulf %123, %127 : vector<8x32xf32>
    %129 = arith.addf %109, %128 : vector<8x32xf32>
    %130 = vector.extract_strided_slice %5 {offsets = [48, 0], sizes = [8, 128], strides = [1, 1]} : vector<64x128xf32> to vector<8x128xf32>
    %cst_22 = arith.constant dense<0.000000e+00> : vector<8x128xf32>
    %131 = tpu.matmul %128, %6, %cst_22 {dimension_numbers = #tpu.dot_dimension_numbers<[1], [0], [0], [1], [0, 0, 1, 1], [], []>} : vector<8x32xf32>, vector<32x128xf32>, vector<8x128xf32> -> vector<8x128xf32>
    %132 = arith.addf %130, %131 : vector<8x128xf32>
    %133 = vector.extract_strided_slice %132 {offsets = [0, 0], sizes = [8, 96], strides = [1, 1]} : vector<8x128xf32> to vector<8x96xf32>
    %134 = arith.negf %133 : vector<8x96xf32>
    %135 = math.exp %134 : vector<8x96xf32>
    %cst_23 = arith.constant 1.000000e+00 : f32
    %136 = vector.broadcast %cst_23 : f32 to vector<8x96xf32>
    %137 = arith.addf %136, %135 : vector<8x96xf32>
    %138 = arith.divf %136, %137 : vector<8x96xf32>
    %139 = vector.extract_strided_slice %132 {offsets = [0, 96], sizes = [8, 32], strides = [1, 1]} : vector<8x128xf32> to vector<8x32xf32>
    %140 = math.tanh %139 : vector<8x32xf32>
    %141 = vector.extract_strided_slice %138 {offsets = [0, 0], sizes = [8, 32], strides = [1, 1]} : vector<8x96xf32> to vector<8x32xf32>
    %142 = vector.extract_strided_slice %138 {offsets = [0, 32], sizes = [8, 32], strides = [1, 1]} : vector<8x96xf32> to vector<8x32xf32>
    %143 = vector.extract_strided_slice %138 {offsets = [0, 64], sizes = [8, 32], strides = [1, 1]} : vector<8x96xf32> to vector<8x32xf32>
    %144 = arith.mulf %142, %126 : vector<8x32xf32>
    %145 = arith.mulf %141, %140 : vector<8x32xf32>
    %146 = arith.addf %144, %145 : vector<8x32xf32>
    %147 = math.tanh %146 : vector<8x32xf32>
    %148 = arith.mulf %143, %147 : vector<8x32xf32>
    %149 = arith.addf %129, %148 : vector<8x32xf32>
    %150 = vector.extract_strided_slice %5 {offsets = [56, 0], sizes = [8, 128], strides = [1, 1]} : vector<64x128xf32> to vector<8x128xf32>
    %cst_24 = arith.constant dense<0.000000e+00> : vector<8x128xf32>
    %151 = tpu.matmul %148, %6, %cst_24 {dimension_numbers = #tpu.dot_dimension_numbers<[1], [0], [0], [1], [0, 0, 1, 1], [], []>} : vector<8x32xf32>, vector<32x128xf32>, vector<8x128xf32> -> vector<8x128xf32>
    %152 = arith.addf %150, %151 : vector<8x128xf32>
    %153 = vector.extract_strided_slice %152 {offsets = [0, 0], sizes = [8, 96], strides = [1, 1]} : vector<8x128xf32> to vector<8x96xf32>
    %154 = arith.negf %153 : vector<8x96xf32>
    %155 = math.exp %154 : vector<8x96xf32>
    %cst_25 = arith.constant 1.000000e+00 : f32
    %156 = vector.broadcast %cst_25 : f32 to vector<8x96xf32>
    %157 = arith.addf %156, %155 : vector<8x96xf32>
    %158 = arith.divf %156, %157 : vector<8x96xf32>
    %159 = vector.extract_strided_slice %152 {offsets = [0, 96], sizes = [8, 32], strides = [1, 1]} : vector<8x128xf32> to vector<8x32xf32>
    %160 = math.tanh %159 : vector<8x32xf32>
    %161 = vector.extract_strided_slice %158 {offsets = [0, 0], sizes = [8, 32], strides = [1, 1]} : vector<8x96xf32> to vector<8x32xf32>
    %162 = vector.extract_strided_slice %158 {offsets = [0, 32], sizes = [8, 32], strides = [1, 1]} : vector<8x96xf32> to vector<8x32xf32>
    %163 = vector.extract_strided_slice %158 {offsets = [0, 64], sizes = [8, 32], strides = [1, 1]} : vector<8x96xf32> to vector<8x32xf32>
    %164 = arith.mulf %162, %146 : vector<8x32xf32>
    %165 = arith.mulf %161, %160 : vector<8x32xf32>
    %166 = arith.addf %164, %165 : vector<8x32xf32>
    %167 = math.tanh %166 : vector<8x32xf32>
    %168 = arith.mulf %163, %167 : vector<8x32xf32>
    %169 = arith.addf %149, %168 : vector<8x32xf32>
    %cst_26 = arith.constant 1.250000e-01 : f32
    %170 = vector.broadcast %cst_26 : f32 to vector<8x32xf32>
    %171 = arith.mulf %169, %170 : vector<8x32xf32>
    %c0_27 = arith.constant 0 : index
    %c0_28 = arith.constant 0 : index
    %172 = vector.load %arg4[%c0_27, %c0_28] : memref<8x32xf32, #tpu.memory_space<vmem>>, vector<8x32xf32>
    tpu.vector_store %arg4[%c0_27, %c0_28], %171 {strides = array<i32>} : memref<8x32xf32, #tpu.memory_space<vmem>>, vector<8x32xf32>,
    return
  }
}

</mosaic_0001>

<llo_original>
// kernel: tpu_custom_call.1
$region0: #{tpu_custom_call.1}
  #allocation0 [shape = 'u32[]', space=smem, size = 0x4, offset = 0x4, fixed_abs, tag = 'smem constant byte address 0x4 - core index']
  #allocation1 [shape = 'u32[144,128]{1,0:T(1,128)}', space=vmem, size = 0x12000, scoped, tag = 'internal scratch']
  %s0 = inlined_call_operand.vmem [shape: f32[64,16], index: 0, kind: input, shape index: {}]
  %s1 = inlined_call_operand.vmem [shape: f32[16,128], index: 1, kind: input, shape index: {}]
  %s2 = inlined_call_operand.vmem [shape: f32[32,128], index: 2, kind: input, shape index: {}]
  %s3 = inlined_call_operand.vmem [shape: f32[1,128], index: 3, kind: input, shape index: {}]
  %s4 = inlined_call_operand.hbm [shape: f32[8,32], index: 4, kind: output, shape index: {}]
  %s5 = sld [smem:[#allocation0]]
  $region26: #{tpu_custom_call.1} parent=0
    _
  %s7 = ssub.s32 1, %s5
  %s8 = scalar_select 0, %s7, %s5
  $region1: #{tpu_custom_call.1} parent=0
    #allocation2 [shape = 'u8[4096]{0}', space=vmem, size = 0x1000, scoped, tag = 'output window, operand 0, single buffered']
    #allocation3 [shape = 's32[1]{0}', space=sflag, size = 0x4, scoped, tag = 'scoped memory for tpu_custom_call.1']
    %9 = vsyncpa [#allocation3], 0
    // Predicated region
    $region2: #{tpu_custom_call.1} parent=1 // pred_check
      _
    $region3: #{tpu_custom_call.1} parent=1 // pred_check_branch
      %11 = sbr.rel (0) target = $region5
    $region4: #{tpu_custom_call.1} parent=1 // pred_region
      _
    $region5: #{tpu_custom_call.1} parent=1 // pred_fallthru
      _
    // Predicated region
    $region6: #{tpu_custom_call.1} parent=1 // pred_check
      _
    $region7: #{tpu_custom_call.1} parent=1 // pred_check_branch
      %13 = sbr.rel (0) target = $region9
    $region8: #{tpu_custom_call.1} parent=1 // pred_region
      _
    $region9: #{tpu_custom_call.1} parent=1 // pred_fallthru
      _
    // Predicated region
    $region10: #{tpu_custom_call.1} parent=1 // pred_check
      _
    $region11: #{tpu_custom_call.1} parent=1 // pred_check_branch
      %15 = sbr.rel (0) target = $region13
    $region12: #{tpu_custom_call.1} parent=1 // pred_region
      _
    $region13: #{tpu_custom_call.1} parent=1 // pred_fallthru
      _
    // Predicated region
    $region14: #{tpu_custom_call.1} parent=1 // pred_check
      _
    $region15: #{tpu_custom_call.1} parent=1 // pred_check_branch
      %17 = sbr.rel (0) target = $region17
    $region16: #{tpu_custom_call.1} parent=1 // pred_region
      _
    $region17: #{tpu_custom_call.1} parent=1 // pred_fallthru
      _
    %v18 = vld [vmem:[%s0] sm:$0xff]
    %v19 = vld [vmem:[%s0 + $0x8] sm:$0xff]
    %v20 = vld [vmem:[%s0 + $0x10] sm:$0xff]
    %v21 = vld [vmem:[%s0 + $0x18] sm:$0xff]
    %v22 = vld [vmem:[%s0 + $0x20] sm:$0xff]
    %v23 = vld [vmem:[%s0 + $0x28] sm:$0xff]
    %v24 = vld [vmem:[%s0 + $0x30] sm:$0xff]
    %v25 = vld [vmem:[%s0 + $0x38] sm:$0xff]
    %v26 = vld [vmem:[%s1] sm:$0xff]
    %v27 = vld [vmem:[%s1 + $0x8] sm:$0xff]
    %v28 = vld [vmem:[%s3] sm:$0x1]
    %v30 = vlaneseq
    %v31 = vshrl.u32 %v30, 7
    %v32 = vsub.s32 0, %v31
    %v33 = vrot.slane %v28, %v32
    %vm35 = vcmask 130048
    %v37 = vsel %vm35, %v18, 0
    %v40 = vsel %vm35, %v19, 0
    %v43 = vsel %vm35, %v20, 0
    %v46 = vsel %vm35, %v21, 0
    %v49 = vsel %vm35, %v22, 0
    %v52 = vsel %vm35, %v23, 0
    %v55 = vsel %vm35, %v24, 0
    %v58 = vsel %vm35, %v25, 0
    %60 = vmatprep.subr.mxu0 0.0
    %61 = vmatpush1.msra.mxu0 %v26
    %62 = vmatprep.subr.mxu0 0.0
    %63 = vmatpush1.msra.mxu0 %v27
    %64 = vmatprep.subr.mxu0 0.0
    %65 = vmatpush1.msra.mxu0 0.0
    %66 = vmatprep.subr.mxu0 0.0
    %67 = vmatpush1.msra.mxu0 0.0
    %68 = vmatprep.subr.mxu0 0.0
    %69 = vmatpush1.msra.mxu0 0.0
    %70 = vmatprep.subr.mxu0 0.0
    %71 = vmatpush1.msra.mxu0 0.0
    %72 = vmatprep.subr.mxu0 0.0
    %73 = vmatpush1.msra.mxu0 0.0
    %74 = vmatprep.subr.mxu0 0.0
    %75 = vmatpush1.msra.mxu0 0.0
    %76 = vmatprep.subr.mxu0 0.0
    %77 = vmatpush1.msra.mxu0 0.0
    %78 = vmatprep.subr.mxu0 0.0
    %79 = vmatpush1.msra.mxu0 0.0
    %80 = vmatprep.subr.mxu0 0.0
    %81 = vmatpush1.msra.mxu0 0.0
    %82 = vmatprep.subr.mxu0 0.0
    %83 = vmatpush1.msra.mxu0 0.0
    %84 = vmatprep.subr.mxu0 0.0
    %85 = vmatpush1.msra.mxu0 0.0
    %86 = vmatprep.subr.mxu0 0.0
    %87 = vmatpush1.msra.mxu0 0.0
    %88 = vmatprep.subr.mxu0 0.0
    %89 = vmatpush1.msra.mxu0 0.0
    %90 = vmatprep.subr.mxu0 0.0
    %91 = vmatpush1.msra.mxu0 0.0
    %92 = vmatprep.subr.mxu0 0.0
    %93 = vmatpush1.msra.mxu0 0.0
    %94 = vmatprep.subr.mxu0 0.0
    %95 = vmatpush1.msra.mxu0 0.0
    %96 = vmatprep.subr.mxu0 0.0
    %97 = vmatpush1.msra.mxu0 0.0
    %98 = vmatprep.subr.mxu0 0.0
    %99 = vmatpush1.msra.mxu0 0.0
    %100 = vmatprep.subr.mxu0 0.0
    %101 = vmatpush1.msra.mxu0 0.0
    %102 = vmatprep.subr.mxu0 0.0
    %103 = vmatpush1.msra.mxu0 0.0
    %104 = vmatprep.subr.mxu0 0.0
    %105 = vmatpush1.msra.mxu0 0.0
    %106 = vmatprep.subr.mxu0 0.0
    %107 = vmatpush1.msra.mxu0 0.0
    %108 = vmatprep.subr.mxu0 0.0
    %109 = vmatpush1.msra.mxu0 0.0
    %110 = vmatprep.subr.mxu0 0.0
    %111 = vmatpush1.msra.mxu0 0.0
    %112 = vmatprep.subr.mxu0 0.0
    %113 = vmatpush1.msra.mxu0 0.0
    %114 = vmatprep.subr.mxu0 0.0
    %115 = vmatpush1.msra.mxu0 0.0
    %116 = vmatprep.subr.mxu0 0.0
    %117 = vmatpush1.msra.mxu0 0.0
    %118 = vmatprep.subr.mxu0 0.0
    %119 = vmatpush1.msra.mxu0 0.0
    %120 = vmatprep.subr.mxu0 0.0
    %121 = vmatpush1.msra.mxu0 0.0
    %122 = vmatprep.subr.mxu0 0.0
    %123 = vmatpush1.msra.mxu0 0.0
    %124 = vmatprep.mubr.f32.mxu0 0.0
    %125 = vmatmul.mubr.f32.gmra.mrb[0].mxu0 %v37
    %v126 = vpop.f32.mrb[0].mxu0
    %v127 = vadd.f32 %v33, %v126
    %v128 = vpop.f32.mrb[0].mxu0
    %129 = vmatprep.mubr.f32.mxu0 0.0
    %130 = vmatmul.mubr.f32.gmra.mrb[0].mxu0 %v40
    %v131 = vpop.f32.mrb[0].mxu0
    %v132 = vadd.f32 %v33, %v131
    %v133 = vpop.f32.mrb[0].mxu0
    %134 = vmatprep.mubr.f32.mxu0 0.0
    %135 = vmatmul.mubr.f32.gmra.mrb[0].mxu0 %v43
    %v136 = vpop.f32.mrb[0].mxu0
    %v137 = vadd.f32 %v33, %v136
    %v138 = vpop.f32.mrb[0].mxu0
    %139 = vmatprep.mubr.f32.mxu0 0.0
    %140 = vmatmul.mubr.f32.gmra.mrb[0].mxu0 %v46
    %v141 = vpop.f32.mrb[0].mxu0
    %v142 = vadd.f32 %v33, %v141
    %v143 = vpop.f32.mrb[0].mxu0
    %144 = vmatprep.mubr.f32.mxu0 0.0
    %145 = vmatmul.mubr.f32.gmra.mrb[0].mxu0 %v49
    %v146 = vpop.f32.mrb[0].mxu0
    %v147 = vadd.f32 %v33, %v146
    %v148 = vpop.f32.mrb[0].mxu0
    %149 = vmatprep.mubr.f32.mxu0 0.0
    %150 = vmatmul.mubr.f32.gmra.mrb[0].mxu0 %v52
    %v151 = vpop.f32.mrb[0].mxu0
    %v152 = vadd.f32 %v33, %v151
    %v153 = vpop.f32.mrb[0].mxu0
    %154 = vmatprep.mubr.f32.mxu0 0.0
    %155 = vmatmul.mubr.f32.gmra.mrb[0].mxu0 %v55
    %v156 = vpop.f32.mrb[0].mxu0
    %v157 = vadd.f32 %v33, %v156
    %v158 = vpop.f32.mrb[0].mxu0
    %159 = vmatprep.mubr.f32.mxu0 0.0
    %160 = vmatmul.mubr.f32.gmra.mrb[0].mxu0 %v58
    %v161 = vpop.f32.mrb[0].mxu0
    %v162 = vadd.f32 %v33, %v161
    %v163 = vpop.f32.mrb[0].mxu0
    %164 = vdwg.mxu0
    %v165 = vld [vmem:[%s2] sm:$0xff]
    %v166 = vld [vmem:[%s2 + $0x8] sm:$0xff]
    %v167 = vld [vmem:[%s2 + $0x10] sm:$0xff]
    %v168 = vld [vmem:[%s2 + $0x18] sm:$0xff]
    %vm169 = vcmask 261120
    %v171 = vsel %vm169, 0.0, 0
    %173 = vmatprep.subr.mxu0 0.0
    %174 = vmatpush1.msra.mxu0 %v165
    %175 = vmatprep.subr.mxu0 0.0
    %176 = vmatpush1.msra.mxu0 %v166
    %177 = vmatprep.subr.mxu0 0.0
    %178 = vmatpush1.msra.mxu0 %v167
    %179 = vmatprep.subr.mxu0 0.0
    %180 = vmatpush1.msra.mxu0 %v168
    %181 = vmatprep.subr.mxu0 0.0
    %182 = vmatpush1.msra.mxu0 0.0
    %183 = vmatprep.subr.mxu0 0.0
    %184 = vmatpush1.msra.mxu0 0.0
    %185 = vmatprep.subr.mxu0 0.0
    %186 = vmatpush1.msra.mxu0 0.0
    %187 = vmatprep.subr.mxu0 0.0
    %188 = vmatpush1.msra.mxu0 0.0
    %189 = vmatprep.subr.mxu0 0.0
    %190 = vmatpush1.msra.mxu0 0.0
    %191 = vmatprep.subr.mxu0 0.0
    %192 = vmatpush1.msra.mxu0 0.0
    %193 = vmatprep.subr.mxu0 0.0
    %194 = vmatpush1.msra.mxu0 0.0
    %195 = vmatprep.subr.mxu0 0.0
    %196 = vmatpush1.msra.mxu0 0.0
    %197 = vmatprep.subr.mxu0 0.0
    %198 = vmatpush1.msra.mxu0 0.0
    %199 = vmatprep.subr.mxu0 0.0
    %200 = vmatpush1.msra.mxu0 0.0
    %201 = vmatprep.subr.mxu0 0.0
    %202 = vmatpush1.msra.mxu0 0.0
    %203 = vmatprep.subr.mxu0 0.0
    %204 = vmatpush1.msra.mxu0 0.0
    %205 = vmatprep.subr.mxu0 0.0
    %206 = vmatpush1.msra.mxu0 0.0
    %207 = vmatprep.subr.mxu0 0.0
    %208 = vmatpush1.msra.mxu0 0.0
    %209 = vmatprep.subr.mxu0 0.0
    %210 = vmatpush1.msra.mxu0 0.0
    %211 = vmatprep.subr.mxu0 0.0
    %212 = vmatpush1.msra.mxu0 0.0
    %213 = vmatprep.subr.mxu0 0.0
    %214 = vmatpush1.msra.mxu0 0.0
    %215 = vmatprep.subr.mxu0 0.0
    %216 = vmatpush1.msra.mxu0 0.0
    %217 = vmatprep.subr.mxu0 0.0
    %218 = vmatpush1.msra.mxu0 0.0
    %219 = vmatprep.subr.mxu0 0.0
    %220 = vmatpush1.msra.mxu0 0.0
    %221 = vmatprep.subr.mxu0 0.0
    %222 = vmatpush1.msra.mxu0 0.0
    %223 = vmatprep.subr.mxu0 0.0
    %224 = vmatpush1.msra.mxu0 0.0
    %225 = vmatprep.subr.mxu0 0.0
    %226 = vmatpush1.msra.mxu0 0.0
    %227 = vmatprep.subr.mxu0 0.0
    %228 = vmatpush1.msra.mxu0 0.0
    %229 = vmatprep.subr.mxu0 0.0
    %230 = vmatpush1.msra.mxu0 0.0
    %231 = vmatprep.subr.mxu0 0.0
    %232 = vmatpush1.msra.mxu0 0.0
    %233 = vmatprep.subr.mxu0 0.0
    %234 = vmatpush1.msra.mxu0 0.0
    %235 = vmatprep.subr.mxu0 0.0
    %236 = vmatpush1.msra.mxu0 0.0
    %237 = vmatprep.mubr.f32.mxu0 0.0
    %238 = vmatmul.mubr.f32.gmra.mrb[0].mxu0 %v171
    %v239 = vpop.f32.mrb[0].mxu0
    %v240 = vadd.f32 0.0, %v239
    %v241 = vpop.f32.mrb[0].mxu0
    %242 = vdwg.mxu0
    %v243 = vadd.f32 %v127, %v240
    %v244 = vxor.u32 %v243, 2147483648
    %v245 = vmul.f32 %v244, 1.442695
    %v246 = vpow.pop %v245
    %v247 = vadd.f32 %v246, 1.0
    %v248 = vrcp.pop %v247
    %v249 = vmul.f32 1.0, %v248
    %v250 = vtanh.pop %v243
    %v251 = vmul.f32 %v249, 0.0
    %253 = vrot.lane.b32.xlu0 %v250, 32
    %v254 = vpop.permute.xlu0 %253
    %v256 = vmul.f32 %v249, %v254
    %258 = vrot.lane.b32.xlu0 %v256, 32
    %v259 = vpop.permute.xlu0 %258
    %v261 = vadd.f32 %v251, %v259
    %v262 = vtanh.pop %v261
    %264 = vrot.lane.b32.xlu0 %v262, 32
    %v265 = vpop.permute.xlu0 %264
    %v267 = vmul.f32 %v249, %v265
    %v268 = vadd.f32 %v267, 0.0
    %270 = vrot.lane.b32.xlu0 %v267, 64
    %v271 = vpop.permute.xlu0 %270
    %v272 = vsel %vm169, %v271, 0
    %274 = vmatprep.subr.mxu0 0.0
    %275 = vmatpush1.msra.mxu0 %v165
    %276 = vmatprep.subr.mxu0 0.0
    %277 = vmatpush1.msra.mxu0 %v166
    %278 = vmatprep.subr.mxu0 0.0
    %279 = vmatpush1.msra.mxu0 %v167
    %280 = vmatprep.subr.mxu0 0.0
    %281 = vmatpush1.msra.mxu0 %v168
    %282 = vmatprep.subr.mxu0 0.0
    %283 = vmatpush1.msra.mxu0 0.0
    %284 = vmatprep.subr.mxu0 0.0
    %285 = vmatpush1.msra.mxu0 0.0
    %286 = vmatprep.subr.mxu0 0.0
    %287 = vmatpush1.msra.mxu0 0.0
    %288 = vmatprep.subr.mxu0 0.0
    %289 = vmatpush1.msra.mxu0 0.0
    %290 = vmatprep.subr.mxu0 0.0
    %291 = vmatpush1.msra.mxu0 0.0
    %292 = vmatprep.subr.mxu0 0.0
    %293 = vmatpush1.msra.mxu0 0.0
    %294 = vmatprep.subr.mxu0 0.0
    %295 = vmatpush1.msra.mxu0 0.0
    %296 = vmatprep.subr.mxu0 0.0
    %297 = vmatpush1.msra.mxu0 0.0
    %298 = vmatprep.subr.mxu0 0.0
    %299 = vmatpush1.msra.mxu0 0.0
    %300 = vmatprep.subr.mxu0 0.0
    %301 = vmatpush1.msra.mxu0 0.0
    %302 = vmatprep.subr.mxu0 0.0
    %303 = vmatpush1.msra.mxu0 0.0
    %304 = vmatprep.subr.mxu0 0.0
    %305 = vmatpush1.msra.mxu0 0.0
    %306 = vmatprep.subr.mxu0 0.0
    %307 = vmatpush1.msra.mxu0 0.0
    %308 = vmatprep.subr.mxu0 0.0
    %309 = vmatpush1.msra.mxu0 0.0
    %310 = vmatprep.subr.mxu0 0.0
    %311 = vmatpush1.msra.mxu0 0.0
    %312 = vmatprep.subr.mxu0 0.0
    %313 = vmatpush1.msra.mxu0 0.0
    %314 = vmatprep.subr.mxu0 0.0
    %315 = vmatpush1.msra.mxu0 0.0
    %316 = vmatprep.subr.mxu0 0.0
    %317 = vmatpush1.msra.mxu0 0.0
    %318 = vmatprep.subr.mxu0 0.0
    %319 = vmatpush1.msra.mxu0 0.0
    %320 = vmatprep.subr.mxu0 0.0
    %321 = vmatpush1.msra.mxu0 0.0
    %322 = vmatprep.subr.mxu0 0.0
    %323 = vmatpush1.msra.mxu0 0.0
    %324 = vmatprep.subr.mxu0 0.0
    %325 = vmatpush1.msra.mxu0 0.0
    %326 = vmatprep.subr.mxu0 0.0
    %327 = vmatpush1.msra.mxu0 0.0
    %328 = vmatprep.subr.mxu0 0.0
    %329 = vmatpush1.msra.mxu0 0.0
    %330 = vmatprep.subr.mxu0 0.0
    %331 = vmatpush1.msra.mxu0 0.0
    %332 = vmatprep.subr.mxu0 0.0
    %333 = vmatpush1.msra.mxu0 0.0
    %334 = vmatprep.subr.mxu0 0.0
    %335 = vmatpush1.msra.mxu0 0.0
    %336 = vmatprep.subr.mxu0 0.0
    %337 = vmatpush1.msra.mxu0 0.0
    %338 = vmatprep.mubr.f32.mxu0 0.0
    %339 = vmatmul.mubr.f32.gmra.mrb[0].mxu0 %v272
    %v340 = vpop.f32.mrb[0].mxu0
    %v341 = vadd.f32 0.0, %v340
    %v342 = vpop.f32.mrb[0].mxu0
    %343 = vdwg.mxu0
    %v344 = vadd.f32 %v132, %v341
    %v345 = vxor.u32 %v344, 2147483648
    %v346 = vmul.f32 %v345, 1.442695
    %v347 = vpow.pop %v346
    %v348 = vadd.f32 %v347, 1.0
    %v349 = vrcp.pop %v348
    %v350 = vmul.f32 1.0, %v349
    %v351 = vtanh.pop %v344
    %v352 = vmul.f32 %v350, %v261
    %354 = vrot.lane.b32.xlu0 %v351, 32
    %v355 = vpop.permute.xlu0 %354
    %v357 = vmul.f32 %v350, %v355
    %359 = vrot.lane.b32.xlu0 %v357, 32
    %v360 = vpop.permute.xlu0 %359
    %v362 = vadd.f32 %v352, %v360
    %v363 = vtanh.pop %v362
    %365 = vrot.lane.b32.xlu0 %v363, 32
    %v366 = vpop.permute.xlu0 %365
    %v368 = vmul.f32 %v350, %v366
    %v369 = vadd.f32 %v268, %v368
    %371 = vrot.lane.b32.xlu0 %v368, 64
    %v372 = vpop.permute.xlu0 %371
    %v373 = vsel %vm169, %v372, 0
    %375 = vmatprep.subr.mxu0 0.0
    %376 = vmatpush1.msra.mxu0 %v165
    %377 = vmatprep.subr.mxu0 0.0
    %378 = vmatpush1.msra.mxu0 %v166
    %379 = vmatprep.subr.mxu0 0.0
    %380 = vmatpush1.msra.mxu0 %v167
    %381 = vmatprep.subr.mxu0 0.0
    %382 = vmatpush1.msra.mxu0 %v168
    %383 = vmatprep.subr.mxu0 0.0
    %384 = vmatpush1.msra.mxu0 0.0
    %385 = vmatprep.subr.mxu0 0.0
    %386 = vmatpush1.msra.mxu0 0.0
    %387 = vmatprep.subr.mxu0 0.0
    %388 = vmatpush1.msra.mxu0 0.0
    %389 = vmatprep.subr.mxu0 0.0
    %390 = vmatpush1.msra.mxu0 0.0
    %391 = vmatprep.subr.mxu0 0.0
    %392 = vmatpush1.msra.mxu0 0.0
    %393 = vmatprep.subr.mxu0 0.0
    %394 = vmatpush1.msra.mxu0 0.0
    %395 = vmatprep.subr.mxu0 0.0
    %396 = vmatpush1.msra.mxu0 0.0
    %397 = vmatprep.subr.mxu0 0.0
    %398 = vmatpush1.msra.mxu0 0.0
    %399 = vmatprep.subr.mxu0 0.0
    %400 = vmatpush1.msra.mxu0 0.0
    %401 = vmatprep.subr.mxu0 0.0
    %402 = vmatpush1.msra.mxu0 0.0
    %403 = vmatprep.subr.mxu0 0.0
    %404 = vmatpush1.msra.mxu0 0.0
    %405 = vmatprep.subr.mxu0 0.0
    %406 = vmatpush1.msra.mxu0 0.0
    %407 = vmatprep.subr.mxu0 0.0
    %408 = vmatpush1.msra.mxu0 0.0
    %409 = vmatprep.subr.mxu0 0.0
    %410 = vmatpush1.msra.mxu0 0.0
    %411 = vmatprep.subr.mxu0 0.0
    %412 = vmatpush1.msra.mxu0 0.0
    %413 = vmatprep.subr.mxu0 0.0
    %414 = vmatpush1.msra.mxu0 0.0
    %415 = vmatprep.subr.mxu0 0.0
    %416 = vmatpush1.msra.mxu0 0.0
    %417 = vmatprep.subr.mxu0 0.0
    %418 = vmatpush1.msra.mxu0 0.0
    %419 = vmatprep.subr.mxu0 0.0
    %420 = vmatpush1.msra.mxu0 0.0
    %421 = vmatprep.subr.mxu0 0.0
    %422 = vmatpush1.msra.mxu0 0.0
    %423 = vmatprep.subr.mxu0 0.0
    %424 = vmatpush1.msra.mxu0 0.0
    %425 = vmatprep.subr.mxu0 0.0
    %426 = vmatpush1.msra.mxu0 0.0
    %427 = vmatprep.subr.mxu0 0.0
    %428 = vmatpush1.msra.mxu0 0.0
    %429 = vmatprep.subr.mxu0 0.0
    %430 = vmatpush1.msra.mxu0 0.0
    %431 = vmatprep.subr.mxu0 0.0
    %432 = vmatpush1.msra.mxu0 0.0
    %433 = vmatprep.subr.mxu0 0.0
    %434 = vmatpush1.msra.mxu0 0.0
    %435 = vmatprep.subr.mxu0 0.0
    %436 = vmatpush1.msra.mxu0 0.0
    %437 = vmatprep.subr.mxu0 0.0
    %438 = vmatpush1.msra.mxu0 0.0
    %439 = vmatprep.mubr.f32.mxu0 0.0
    %440 = vmatmul.mubr.f32.gmra.mrb[0].mxu0 %v373
    %v441 = vpop.f32.mrb[0].mxu0
    %v442 = vadd.f32 0.0, %v441
    %v443 = vpop.f32.mrb[0].mxu0
    %444 = vdwg.mxu0
    %v445 = vadd.f32 %v137, %v442
    %v446 = vxor.u32 %v445, 2147483648
    %v447 = vmul.f32 %v446, 1.442695
    %v448 = vpow.pop %v447
    %v449 = vadd.f32 %v448, 1.0
    %v450 = vrcp.pop %v449
    %v451 = vmul.f32 1.0, %v450
    %v452 = vtanh.pop %v445
    %v453 = vmul.f32 %v451, %v362
    %455 = vrot.lane.b32.xlu0 %v452, 32
    %v456 = vpop.permute.xlu0 %455
    %v458 = vmul.f32 %v451, %v456
    %460 = vrot.lane.b32.xlu0 %v458, 32
    %v461 = vpop.permute.xlu0 %460
    %v463 = vadd.f32 %v453, %v461
    %v464 = vtanh.pop %v463
    %466 = vrot.lane.b32.xlu0 %v464, 32
    %v467 = vpop.permute.xlu0 %466
    %v469 = vmul.f32 %v451, %v467
    %v470 = vadd.f32 %v369, %v469
    %472 = vrot.lane.b32.xlu0 %v469, 64
    %v473 = vpop.permute.xlu0 %472
    %v474 = vsel %vm169, %v473, 0
    %476 = vmatprep.subr.mxu0 0.0
    %477 = vmatpush1.msra.mxu0 %v165
    %478 = vmatprep.subr.mxu0 0.0
    %479 = vmatpush1.msra.mxu0 %v166
    %480 = vmatprep.subr.mxu0 0.0
    %481 = vmatpush1.msra.mxu0 %v167
    %482 = vmatprep.subr.mxu0 0.0
    %483 = vmatpush1.msra.mxu0 %v168
    %484 = vmatprep.subr.mxu0 0.0
    %485 = vmatpush1.msra.mxu0 0.0
    %486 = vmatprep.subr.mxu0 0.0
    %487 = vmatpush1.msra.mxu0 0.0
    %488 = vmatprep.subr.mxu0 0.0
    %489 = vmatpush1.msra.mxu0 0.0
    %490 = vmatprep.subr.mxu0 0.0
    %491 = vmatpush1.msra.mxu0 0.0
    %492 = vmatprep.subr.mxu0 0.0
    %493 = vmatpush1.msra.mxu0 0.0
    %494 = vmatprep.subr.mxu0 0.0
    %495 = vmatpush1.msra.mxu0 0.0
    %496 = vmatprep.subr.mxu0 0.0
    %497 = vmatpush1.msra.mxu0 0.0
    %498 = vmatprep.subr.mxu0 0.0
    %499 = vmatpush1.msra.mxu0 0.0
    %500 = vmatprep.subr.mxu0 0.0
    %501 = vmatpush1.msra.mxu0 0.0
    %502 = vmatprep.subr.mxu0 0.0
    %503 = vmatpush1.msra.mxu0 0.0
    %504 = vmatprep.subr.mxu0 0.0
    %505 = vmatpush1.msra.mxu0 0.0
    %506 = vmatprep.subr.mxu0 0.0
    %507 = vmatpush1.msra.mxu0 0.0
    %508 = vmatprep.subr.mxu0 0.0
    %509 = vmatpush1.msra.mxu0 0.0
    %510 = vmatprep.subr.mxu0 0.0
    %511 = vmatpush1.msra.mxu0 0.0
    %512 = vmatprep.subr.mxu0 0.0
    %513 = vmatpush1.msra.mxu0 0.0
    %514 = vmatprep.subr.mxu0 0.0
    %515 = vmatpush1.msra.mxu0 0.0
    %516 = vmatprep.subr.mxu0 0.0
    %517 = vmatpush1.msra.mxu0 0.0
    %518 = vmatprep.subr.mxu0 0.0
    %519 = vmatpush1.msra.mxu0 0.0
    %520 = vmatprep.subr.mxu0 0.0
    %521 = vmatpush1.msra.mxu0 0.0
    %522 = vmatprep.subr.mxu0 0.0
    %523 = vmatpush1.msra.mxu0 0.0
    %524 = vmatprep.subr.mxu0 0.0
    %525 = vmatpush1.msra.mxu0 0.0
    %526 = vmatprep.subr.mxu0 0.0
    %527 = vmatpush1.msra.mxu0 0.0
    %528 = vmatprep.subr.mxu0 0.0
    %529 = vmatpush1.msra.mxu0 0.0
    %530 = vmatprep.subr.mxu0 0.0
    %531 = vmatpush1.msra.mxu0 0.0
    %532 = vmatprep.subr.mxu0 0.0
    %533 = vmatpush1.msra.mxu0 0.0
    %534 = vmatprep.subr.mxu0 0.0
    %535 = vmatpush1.msra.mxu0 0.0
    %536 = vmatprep.subr.mxu0 0.0
    %537 = vmatpush1.msra.mxu0 0.0
    %538 = vmatprep.subr.mxu0 0.0
    %539 = vmatpush1.msra.mxu0 0.0
    %540 = vmatprep.mubr.f32.mxu0 0.0
    %541 = vmatmul.mubr.f32.gmra.mrb[0].mxu0 %v474
    %v542 = vpop.f32.mrb[0].mxu0
    %v543 = vadd.f32 0.0, %v542
    %v544 = vpop.f32.mrb[0].mxu0
    %545 = vdwg.mxu0
    %v546 = vadd.f32 %v142, %v543
    %v547 = vxor.u32 %v546, 2147483648
    %v548 = vmul.f32 %v547, 1.442695
    %v549 = vpow.pop %v548
    %v550 = vadd.f32 %v549, 1.0
    %v551 = vrcp.pop %v550
    %v552 = vmul.f32 1.0, %v551
    %v553 = vtanh.pop %v546
    %v554 = vmul.f32 %v552, %v463
    %556 = vrot.lane.b32.xlu0 %v553, 32
    %v557 = vpop.permute.xlu0 %556
    %v559 = vmul.f32 %v552, %v557
    %561 = vrot.lane.b32.xlu0 %v559, 32
    %v562 = vpop.permute.xlu0 %561
    %v564 = vadd.f32 %v554, %v562
    %v565 = vtanh.pop %v564
    %567 = vrot.lane.b32.xlu0 %v565, 32
    %v568 = vpop.permute.xlu0 %567
    %v570 = vmul.f32 %v552, %v568
    %v571 = vadd.f32 %v470, %v570
    %573 = vrot.lane.b32.xlu0 %v570, 64
    %v574 = vpop.permute.xlu0 %573
    %v575 = vsel %vm169, %v574, 0
    %577 = vmatprep.subr.mxu0 0.0
    %578 = vmatpush1.msra.mxu0 %v165
    %579 = vmatprep.subr.mxu0 0.0
    %580 = vmatpush1.msra.mxu0 %v166
    %581 = vmatprep.subr.mxu0 0.0
    %582 = vmatpush1.msra.mxu0 %v167
    %583 = vmatprep.subr.mxu0 0.0
    %584 = vmatpush1.msra.mxu0 %v168
    %585 = vmatprep.subr.mxu0 0.0
    %586 = vmatpush1.msra.mxu0 0.0
    %587 = vmatprep.subr.mxu0 0.0
    %588 = vmatpush1.msra.mxu0 0.0
    %589 = vmatprep.subr.mxu0 0.0
    %590 = vmatpush1.msra.mxu0 0.0
    %591 = vmatprep.subr.mxu0 0.0
    %592 = vmatpush1.msra.mxu0 0.0
    %593 = vmatprep.subr.mxu0 0.0
    %594 = vmatpush1.msra.mxu0 0.0
    %595 = vmatprep.subr.mxu0 0.0
    %596 = vmatpush1.msra.mxu0 0.0
    %597 = vmatprep.subr.mxu0 0.0
    %598 = vmatpush1.msra.mxu0 0.0
    %599 = vmatprep.subr.mxu0 0.0
    %600 = vmatpush1.msra.mxu0 0.0
    %601 = vmatprep.subr.mxu0 0.0
    %602 = vmatpush1.msra.mxu0 0.0
    %603 = vmatprep.subr.mxu0 0.0
    %604 = vmatpush1.msra.mxu0 0.0
    %605 = vmatprep.subr.mxu0 0.0
    %606 = vmatpush1.msra.mxu0 0.0
    %607 = vmatprep.subr.mxu0 0.0
    %608 = vmatpush1.msra.mxu0 0.0
    %609 = vmatprep.subr.mxu0 0.0
    %610 = vmatpush1.msra.mxu0 0.0
    %611 = vmatprep.subr.mxu0 0.0
    %612 = vmatpush1.msra.mxu0 0.0
    %613 = vmatprep.subr.mxu0 0.0
    %614 = vmatpush1.msra.mxu0 0.0
    %615 = vmatprep.subr.mxu0 0.0
    %616 = vmatpush1.msra.mxu0 0.0
    %617 = vmatprep.subr.mxu0 0.0
    %618 = vmatpush1.msra.mxu0 0.0
    %619 = vmatprep.subr.mxu0 0.0
    %620 = vmatpush1.msra.mxu0 0.0
    %621 = vmatprep.subr.mxu0 0.0
    %622 = vmatpush1.msra.mxu0 0.0
    %623 = vmatprep.subr.mxu0 0.0
    %624 = vmatpush1.msra.mxu0 0.0
    %625 = vmatprep.subr.mxu0 0.0
    %626 = vmatpush1.msra.mxu0 0.0
    %627 = vmatprep.subr.mxu0 0.0
    %628 = vmatpush1.msra.mxu0 0.0
    %629 = vmatprep.subr.mxu0 0.0
    %630 = vmatpush1.msra.mxu0 0.0
    %631 = vmatprep.subr.mxu0 0.0
    %632 = vmatpush1.msra.mxu0 0.0
    %633 = vmatprep.subr.mxu0 0.0
    %634 = vmatpush1.msra.mxu0 0.0
    %635 = vmatprep.subr.mxu0 0.0
    %636 = vmatpush1.msra.mxu0 0.0
    %637 = vmatprep.subr.mxu0 0.0
    %638 = vmatpush1.msra.mxu0 0.0
    %639 = vmatprep.subr.mxu0 0.0
    %640 = vmatpush1.msra.mxu0 0.0
    %641 = vmatprep.mubr.f32.mxu0 0.0
    %642 = vmatmul.mubr.f32.gmra.mrb[0].mxu0 %v575
    %v643 = vpop.f32.mrb[0].mxu0
    %v644 = vadd.f32 0.0, %v643
    %v645 = vpop.f32.mrb[0].mxu0
    %646 = vdwg.mxu0
    %v647 = vadd.f32 %v147, %v644
    %v648 = vxor.u32 %v647, 2147483648
    %v649 = vmul.f32 %v648, 1.442695
    %v650 = vpow.pop %v649
    %v651 = vadd.f32 %v650, 1.0
    %v652 = vrcp.pop %v651
    %v653 = vmul.f32 1.0, %v652
    %v654 = vtanh.pop %v647
    %v655 = vmul.f32 %v653, %v564
    %657 = vrot.lane.b32.xlu0 %v654, 32
    %v658 = vpop.permute.xlu0 %657
    %v660 = vmul.f32 %v653, %v658
    %662 = vrot.lane.b32.xlu0 %v660, 32
    %v663 = vpop.permute.xlu0 %662
    %v665 = vadd.f32 %v655, %v663
    %v666 = vtanh.pop %v665
    %668 = vrot.lane.b32.xlu0 %v666, 32
    %v669 = vpop.permute.xlu0 %668
    %v671 = vmul.f32 %v653, %v669
    %v672 = vadd.f32 %v571, %v671
    %674 = vrot.lane.b32.xlu0 %v671, 64
    %v675 = vpop.permute.xlu0 %674
    %v676 = vsel %vm169, %v675, 0
    %678 = vmatprep.subr.mxu0 0.0
    %679 = vmatpush1.msra.mxu0 %v165
    %680 = vmatprep.subr.mxu0 0.0
    %681 = vmatpush1.msra.mxu0 %v166
    %682 = vmatprep.subr.mxu0 0.0
    %683 = vmatpush1.msra.mxu0 %v167
    %684 = vmatprep.subr.mxu0 0.0
    %685 = vmatpush1.msra.mxu0 %v168
    %686 = vmatprep.subr.mxu0 0.0
    %687 = vmatpush1.msra.mxu0 0.0
    %688 = vmatprep.subr.mxu0 0.0
    %689 = vmatpush1.msra.mxu0 0.0
    %690 = vmatprep.subr.mxu0 0.0
    %691 = vmatpush1.msra.mxu0 0.0
    %692 = vmatprep.subr.mxu0 0.0
    %693 = vmatpush1.msra.mxu0 0.0
    %694 = vmatprep.subr.mxu0 0.0
    %695 = vmatpush1.msra.mxu0 0.0
    %696 = vmatprep.subr.mxu0 0.0
    %697 = vmatpush1.msra.mxu0 0.0
    %698 = vmatprep.subr.mxu0 0.0
    %699 = vmatpush1.msra.mxu0 0.0
    %700 = vmatprep.subr.mxu0 0.0
    %701 = vmatpush1.msra.mxu0 0.0
    %702 = vmatprep.subr.mxu0 0.0
    %703 = vmatpush1.msra.mxu0 0.0
    %704 = vmatprep.subr.mxu0 0.0
    %705 = vmatpush1.msra.mxu0 0.0
    %706 = vmatprep.subr.mxu0 0.0
    %707 = vmatpush1.msra.mxu0 0.0
    %708 = vmatprep.subr.mxu0 0.0
    %709 = vmatpush1.msra.mxu0 0.0
    %710 = vmatprep.subr.mxu0 0.0
    %711 = vmatpush1.msra.mxu0 0.0
    %712 = vmatprep.subr.mxu0 0.0
    %713 = vmatpush1.msra.mxu0 0.0
    %714 = vmatprep.subr.mxu0 0.0
    %715 = vmatpush1.msra.mxu0 0.0
    %716 = vmatprep.subr.mxu0 0.0
    %717 = vmatpush1.msra.mxu0 0.0
    %718 = vmatprep.subr.mxu0 0.0
    %719 = vmatpush1.msra.mxu0 0.0
    %720 = vmatprep.subr.mxu0 0.0
    %721 = vmatpush1.msra.mxu0 0.0
    %722 = vmatprep.subr.mxu0 0.0
    %723 = vmatpush1.msra.mxu0 0.0
    %724 = vmatprep.subr.mxu0 0.0
    %725 = vmatpush1.msra.mxu0 0.0
    %726 = vmatprep.subr.mxu0 0.0
    %727 = vmatpush1.msra.mxu0 0.0
    %728 = vmatprep.subr.mxu0 0.0
    %729 = vmatpush1.msra.mxu0 0.0
    %730 = vmatprep.subr.mxu0 0.0
    %731 = vmatpush1.msra.mxu0 0.0
    %732 = vmatprep.subr.mxu0 0.0
    %733 = vmatpush1.msra.mxu0 0.0
    %734 = vmatprep.subr.mxu0 0.0
    %735 = vmatpush1.msra.mxu0 0.0
    %736 = vmatprep.subr.mxu0 0.0
    %737 = vmatpush1.msra.mxu0 0.0
    %738 = vmatprep.subr.mxu0 0.0
    %739 = vmatpush1.msra.mxu0 0.0
    %740 = vmatprep.subr.mxu0 0.0
    %741 = vmatpush1.msra.mxu0 0.0
    %742 = vmatprep.mubr.f32.mxu0 0.0
    %743 = vmatmul.mubr.f32.gmra.mrb[0].mxu0 %v676
    %v744 = vpop.f32.mrb[0].mxu0
    %v745 = vadd.f32 0.0, %v744
    %v746 = vpop.f32.mrb[0].mxu0
    %747 = vdwg.mxu0
    %v748 = vadd.f32 %v152, %v745
    %v749 = vxor.u32 %v748, 2147483648
    %v750 = vmul.f32 %v749, 1.442695
    %v751 = vpow.pop %v750
    %v752 = vadd.f32 %v751, 1.0
    %v753 = vrcp.pop %v752
    %v754 = vmul.f32 1.0, %v753
    %v755 = vtanh.pop %v748
    %v756 = vmul.f32 %v754, %v665
    %758 = vrot.lane.b32.xlu0 %v755, 32
    %v759 = vpop.permute.xlu0 %758
    %v761 = vmul.f32 %v754, %v759
    %763 = vrot.lane.b32.xlu0 %v761, 32
    %v764 = vpop.permute.xlu0 %763
    %v766 = vadd.f32 %v756, %v764
    %v767 = vtanh.pop %v766
    %769 = vrot.lane.b32.xlu0 %v767, 32
    %v770 = vpop.permute.xlu0 %769
    %v772 = vmul.f32 %v754, %v770
    %v773 = vadd.f32 %v672, %v772
    %775 = vrot.lane.b32.xlu0 %v772, 64
    %v776 = vpop.permute.xlu0 %775
    %v777 = vsel %vm169, %v776, 0
    %779 = vmatprep.subr.mxu0 0.0
    %780 = vmatpush1.msra.mxu0 %v165
    %781 = vmatprep.subr.mxu0 0.0
    %782 = vmatpush1.msra.mxu0 %v166
    %783 = vmatprep.subr.mxu0 0.0
    %784 = vmatpush1.msra.mxu0 %v167
    %785 = vmatprep.subr.mxu0 0.0
    %786 = vmatpush1.msra.mxu0 %v168
    %787 = vmatprep.subr.mxu0 0.0
    %788 = vmatpush1.msra.mxu0 0.0
    %789 = vmatprep.subr.mxu0 0.0
    %790 = vmatpush1.msra.mxu0 0.0
    %791 = vmatprep.subr.mxu0 0.0
    %792 = vmatpush1.msra.mxu0 0.0
    %793 = vmatprep.subr.mxu0 0.0
    %794 = vmatpush1.msra.mxu0 0.0
    %795 = vmatprep.subr.mxu0 0.0
    %796 = vmatpush1.msra.mxu0 0.0
    %797 = vmatprep.subr.mxu0 0.0
    %798 = vmatpush1.msra.mxu0 0.0
    %799 = vmatprep.subr.mxu0 0.0
    %800 = vmatpush1.msra.mxu0 0.0
    %801 = vmatprep.subr.mxu0 0.0
    %802 = vmatpush1.msra.mxu0 0.0
    %803 = vmatprep.subr.mxu0 0.0
    %804 = vmatpush1.msra.mxu0 0.0
    %805 = vmatprep.subr.mxu0 0.0
    %806 = vmatpush1.msra.mxu0 0.0
    %807 = vmatprep.subr.mxu0 0.0
    %808 = vmatpush1.msra.mxu0 0.0
    %809 = vmatprep.subr.mxu0 0.0
    %810 = vmatpush1.msra.mxu0 0.0
    %811 = vmatprep.subr.mxu0 0.0
    %812 = vmatpush1.msra.mxu0 0.0
    %813 = vmatprep.subr.mxu0 0.0
    %814 = vmatpush1.msra.mxu0 0.0
    %815 = vmatprep.subr.mxu0 0.0
    %816 = vmatpush1.msra.mxu0 0.0
    %817 = vmatprep.subr.mxu0 0.0
    %818 = vmatpush1.msra.mxu0 0.0
    %819 = vmatprep.subr.mxu0 0.0
    %820 = vmatpush1.msra.mxu0 0.0
    %821 = vmatprep.subr.mxu0 0.0
    %822 = vmatpush1.msra.mxu0 0.0
    %823 = vmatprep.subr.mxu0 0.0
    %824 = vmatpush1.msra.mxu0 0.0
    %825 = vmatprep.subr.mxu0 0.0
    %826 = vmatpush1.msra.mxu0 0.0
    %827 = vmatprep.subr.mxu0 0.0
    %828 = vmatpush1.msra.mxu0 0.0
    %829 = vmatprep.subr.mxu0 0.0
    %830 = vmatpush1.msra.mxu0 0.0
    %831 = vmatprep.subr.mxu0 0.0
    %832 = vmatpush1.msra.mxu0 0.0
    %833 = vmatprep.subr.mxu0 0.0
    %834 = vmatpush1.msra.mxu0 0.0
    %835 = vmatprep.subr.mxu0 0.0
    %836 = vmatpush1.msra.mxu0 0.0
    %837 = vmatprep.subr.mxu0 0.0
    %838 = vmatpush1.msra.mxu0 0.0
    %839 = vmatprep.subr.mxu0 0.0
    %840 = vmatpush1.msra.mxu0 0.0
    %841 = vmatprep.subr.mxu0 0.0
    %842 = vmatpush1.msra.mxu0 0.0
    %843 = vmatprep.mubr.f32.mxu0 0.0
    %844 = vmatmul.mubr.f32.gmra.mrb[0].mxu0 %v777
    %v845 = vpop.f32.mrb[0].mxu0
    %v846 = vadd.f32 0.0, %v845
    %v847 = vpop.f32.mrb[0].mxu0
    %848 = vdwg.mxu0
    %v849 = vadd.f32 %v157, %v846
    %v850 = vxor.u32 %v849, 2147483648
    %v851 = vmul.f32 %v850, 1.442695
    %v852 = vpow.pop %v851
    %v853 = vadd.f32 %v852, 1.0
    %v854 = vrcp.pop %v853
    %v855 = vmul.f32 1.0, %v854
    %v856 = vtanh.pop %v849
    %v857 = vmul.f32 %v855, %v766
    %859 = vrot.lane.b32.xlu0 %v856, 32
    %v860 = vpop.permute.xlu0 %859
    %v862 = vmul.f32 %v855, %v860
    %864 = vrot.lane.b32.xlu0 %v862, 32
    %v865 = vpop.permute.xlu0 %864
    %v867 = vadd.f32 %v857, %v865
    %v868 = vtanh.pop %v867
    %870 = vrot.lane.b32.xlu0 %v868, 32
    %v871 = vpop.permute.xlu0 %870
    %v873 = vmul.f32 %v855, %v871
    %v874 = vadd.f32 %v773, %v873
    %876 = vrot.lane.b32.xlu0 %v873, 64
    %v877 = vpop.permute.xlu0 %876
    %v878 = vsel %vm169, %v877, 0
    %880 = vmatprep.subr.mxu0 0.0
    %881 = vmatpush1.msra.mxu0 %v165
    %882 = vmatprep.subr.mxu0 0.0
    %883 = vmatpush1.msra.mxu0 %v166
    %884 = vmatprep.subr.mxu0 0.0
    %885 = vmatpush1.msra.mxu0 %v167
    %886 = vmatprep.subr.mxu0 0.0
    %887 = vmatpush1.msra.mxu0 %v168
    %888 = vmatprep.subr.mxu0 0.0
    %889 = vmatpush1.msra.mxu0 0.0
    %890 = vmatprep.subr.mxu0 0.0
    %891 = vmatpush1.msra.mxu0 0.0
    %892 = vmatprep.subr.mxu0 0.0
    %893 = vmatpush1.msra.mxu0 0.0
    %894 = vmatprep.subr.mxu0 0.0
    %895 = vmatpush1.msra.mxu0 0.0
    %896 = vmatprep.subr.mxu0 0.0
    %897 = vmatpush1.msra.mxu0 0.0
    %898 = vmatprep.subr.mxu0 0.0
    %899 = vmatpush1.msra.mxu0 0.0
    %900 = vmatprep.subr.mxu0 0.0
    %901 = vmatpush1.msra.mxu0 0.0
    %902 = vmatprep.subr.mxu0 0.0
    %903 = vmatpush1.msra.mxu0 0.0
    %904 = vmatprep.subr.mxu0 0.0
    %905 = vmatpush1.msra.mxu0 0.0
    %906 = vmatprep.subr.mxu0 0.0
    %907 = vmatpush1.msra.mxu0 0.0
    %908 = vmatprep.subr.mxu0 0.0
    %909 = vmatpush1.msra.mxu0 0.0
    %910 = vmatprep.subr.mxu0 0.0
    %911 = vmatpush1.msra.mxu0 0.0
    %912 = vmatprep.subr.mxu0 0.0
    %913 = vmatpush1.msra.mxu0 0.0
    %914 = vmatprep.subr.mxu0 0.0
    %915 = vmatpush1.msra.mxu0 0.0
    %916 = vmatprep.subr.mxu0 0.0
    %917 = vmatpush1.msra.mxu0 0.0
    %918 = vmatprep.subr.mxu0 0.0
    %919 = vmatpush1.msra.mxu0 0.0
    %920 = vmatprep.subr.mxu0 0.0
    %921 = vmatpush1.msra.mxu0 0.0
    %922 = vmatprep.subr.mxu0 0.0
    %923 = vmatpush1.msra.mxu0 0.0
    %924 = vmatprep.subr.mxu0 0.0
    %925 = vmatpush1.msra.mxu0 0.0
    %926 = vmatprep.subr.mxu0 0.0
    %927 = vmatpush1.msra.mxu0 0.0
    %928 = vmatprep.subr.mxu0 0.0
    %929 = vmatpush1.msra.mxu0 0.0
    %930 = vmatprep.subr.mxu0 0.0
    %931 = vmatpush1.msra.mxu0 0.0
    %932 = vmatprep.subr.mxu0 0.0
    %933 = vmatpush1.msra.mxu0 0.0
    %934 = vmatprep.subr.mxu0 0.0
    %935 = vmatpush1.msra.mxu0 0.0
    %936 = vmatprep.subr.mxu0 0.0
    %937 = vmatpush1.msra.mxu0 0.0
    %938 = vmatprep.subr.mxu0 0.0
    %939 = vmatpush1.msra.mxu0 0.0
    %940 = vmatprep.subr.mxu0 0.0
    %941 = vmatpush1.msra.mxu0 0.0
    %942 = vmatprep.subr.mxu0 0.0
    %943 = vmatpush1.msra.mxu0 0.0
    %944 = vmatprep.mubr.f32.mxu0 0.0
    %945 = vmatmul.mubr.f32.gmra.mrb[0].mxu0 %v878
    %v946 = vpop.f32.mrb[0].mxu0
    %v947 = vadd.f32 0.0, %v946
    %v948 = vpop.f32.mrb[0].mxu0
    %949 = vdwg.mxu0
    %v950 = vadd.f32 %v162, %v947
    %v951 = vxor.u32 %v950, 2147483648
    %v952 = vmul.f32 %v951, 1.442695
    %v953 = vpow.pop %v952
    %v954 = vadd.f32 %v953, 1.0
    %v955 = vrcp.pop %v954
    %v956 = vmul.f32 1.0, %v955
    %v957 = vtanh.pop %v950
    %v958 = vmul.f32 %v956, %v867
    %960 = vrot.lane.b32.xlu0 %v957, 32
    %v961 = vpop.permute.xlu0 %960
    %v963 = vmul.f32 %v956, %v961
    %965 = vrot.lane.b32.xlu0 %v963, 32
    %v966 = vpop.permute.xlu0 %965
    %v968 = vadd.f32 %v958, %v966
    %v969 = vtanh.pop %v968
    %971 = vrot.lane.b32.xlu0 %v969, 32
    %v972 = vpop.permute.xlu0 %971
    %v974 = vmul.f32 %v956, %v972
    %v975 = vadd.f32 %v874, %v974
    %v976 = vmul.f32 %v975, 0.125
    %978 = vrot.lane.b32.xlu0 %v976, 64
    %v979 = vpop.permute.xlu0 %978
    %981 = vst.msk [vmem:[#allocation2] sm:$0xff] %vm169, %v979
    // Predicated region
    $region18: #{tpu_custom_call.1} parent=1 // pred_check
      _
    $region19: #{tpu_custom_call.1} parent=1 // pred_check_branch
      %983 = sbr.rel (0) target = $region21
    $region20: #{tpu_custom_call.1} parent=1 // pred_region
      %s985 = ssub.s32 128, 128
      %986 = vsyncadd [#allocation3], %s985
      %s988 = sshll.u32 [#allocation2], 4
      %s989 = int_to_ptr.vmem [resolvable:$true] %s988
      %991 = dma.vmem_to_hbm [thread:$0]  %s989, 128, %s4, [#allocation3]
    $region21: #{tpu_custom_call.1} parent=1 // pred_fallthru
      _
    // Predicated region
    $region22: #{tpu_custom_call.1} parent=1 // pred_check
      _
    $region23: #{tpu_custom_call.1} parent=1 // pred_check_branch
      %993 = sbr.rel (0) target = $region25
    $region24: #{tpu_custom_call.1} parent=1 // pred_region
      %994 = dma.done [#allocation3], 128
    $region25: #{tpu_custom_call.1} parent=1 // pred_fallthru
      _
    %995 = vsyncpa [#allocation3], 1

</llo_original>
